<compile_context>
chip_gen: v7x
topology: tpu7x:2x2x1
jax: 0.10.0
libtpu: 0.0.40
codegen_flags: <defaults>
</compile_context>

<pallas_src>
import functools

import jax
import jax.numpy as jnp
from jax.experimental import pallas as pl
from jax.experimental.pallas import tpu as pltpu


def _head_kernel(x_ref, wkqv_ref, o_ref, *, n_embed, head_size):
    # x_ref: (Bb, T, C) bf16; wkqv_ref: (C, 3H) bf16; o_ref: (Bb, T, H) f32
    Bb, T, C = x_ref.shape
    H = head_size

    x = x_ref[...]            # (Bb, T, C) bf16
    w = wkqv_ref[...]         # (C, 3H)    bf16

    # Fused K/Q/V projection: one contraction over C; (Bb, T) act together as
    # the M dimension of a single MXU matmul with N = 3H. f32 accumulation.
    kqv = jax.lax.dot_general(
        x, w, dimension_numbers=(((2,), (0,)), ((), ())),
        preferred_element_type=jnp.float32)              # (Bb, T, 3H) f32
    k = kqv[:, :, :H]
    q = kqv[:, :, H:2 * H]
    v = kqv[:, :, 2 * H:]

    # Fold the 1/sqrt(C) scale into q (T*H values, not T*T).
    q = q * (n_embed ** -0.5)

    # Scores: contract the head dim of q and k directly (no explicit transpose).
    s = jax.lax.dot_general(
        q.astype(jnp.bfloat16), k.astype(jnp.bfloat16),
        dimension_numbers=(((2,), (2,)), ((0,), (0,))),
        preferred_element_type=jnp.float32)              # (Bb, T, T) f32

    # Causal mask (== masked_fill(tril == 0, -inf)); diagonal is never masked,
    # so every softmax row has at least one finite entry.
    row = jax.lax.broadcasted_iota(jnp.int32, (Bb, T, T), 1)
    col = jax.lax.broadcasted_iota(jnp.int32, (Bb, T, T), 2)
    s = jnp.where(col <= row, s, -jnp.inf)

    # Softmax in f32; divide moved onto the otherwise-idle EUP slot.
    s = s - jnp.max(s, axis=-1, keepdims=True)
    e = jnp.exp(s)
    p = e * pl.reciprocal(jnp.sum(e, axis=-1, keepdims=True), approx=True)

    # Weighted sum of values.
    out = jax.lax.dot_general(
        p.astype(jnp.bfloat16), v.astype(jnp.bfloat16),
        dimension_numbers=(((2,), (1,)), ((0,), (0,))),
        preferred_element_type=jnp.float32)              # (Bb, T, H)

    # TODO(synk): H=16 output is lane-sparse (masked partial stores); making it
    # lane-dense (last dim multiple of 128) needs multi-head fusion, which this
    # single-head module does not expose.
    o_ref[...] = out.astype(o_ref.dtype)
    # TODO(synk): for realistic T (>= ~1-2k), replace the full TxT score block
    # with flash-style KV tiling + online softmax to stay inside v7x VMEM.


def _pick_batch_block(B, max_bb=8):
    """Largest divisor of B that is <= max_bb while keeping >= 2 grid steps
    whenever B >= 2 (so both v7x TensorCores get work)."""
    cap = min(max_bb, max(1, B // 2))
    for bb in range(cap, 0, -1):
        if B % bb == 0:
            return bb
    return 1


def head_forward(x, wk, wq, wv, *, batch_block=None):
    """x: (B, T, C) f32; wk/wq/wv: (C, H) f32 -> (B, T, H) f32.

    Weights are stored transposed vs. torch ((C, H)), so x @ W matches
    torch's x @ W_torch.T.
    """
    B, T, C = x.shape
    H = wk.shape[1]
    Bb = _pick_batch_block(B) if batch_block is None else batch_block
    assert B % Bb == 0, "batch_block must divide B"

    # Fuse the three projection weights once on the host side and cast MXU
    # operands to bf16 (accumulation stays f32 inside the kernel).
    w_kqv = jnp.concatenate([wk, wq, wv], axis=1).astype(jnp.bfloat16)  # (C, 3H)
    x_bf = x.astype(jnp.bfloat16)

    kernel = functools.partial(_head_kernel, n_embed=C, head_size=H)
    return pl.pallas_call(
        kernel,
        out_shape=jax.ShapeDtypeStruct((B, T, H), x.dtype),
        grid_spec=pltpu.PrefetchScalarGridSpec(
            num_scalar_prefetch=0,
            grid=(B // Bb,),
            in_specs=[
                pl.BlockSpec((Bb, T, C), lambda b: (b, 0, 0)),
                pl.BlockSpec((C, 3 * H), lambda b: (0, 0)),
            ],
            out_specs=pl.BlockSpec((Bb, T, H), lambda b: (b, 0, 0)),
        ),
        compiler_params=pltpu.CompilerParams(
            dimension_semantics=("parallel",)),
    )(x_bf, w_kqv)


def head_reference(x, wk, wq, wv):
    """Pure-JAX f32 reference mirroring the PyTorch forward exactly."""
    B, T, C = x.shape
    k = x @ wk
    q = x @ wq
    v = x @ wv
    w = (q @ jnp.swapaxes(k, -2, -1)) * C ** (-0.5)
    tril = jnp.tril(jnp.ones((T, T), dtype=x.dtype))
    w = jnp.where(tril == 0, -jnp.inf, w)
    w = jax.nn.softmax(w, axis=-1)
    return w @ v


if __name__ == "__main__":
    B, T, C, H = 2, 8, 32, 16  # batch, block_size, n_embed, head_size

    key = jax.random.PRNGKey(0)
    kx, kk, kq, kv = jax.random.split(key, 4)
    x = jax.random.normal(kx, (B, T, C), dtype=jnp.float32)
    # torch Linear weight is (H, C); store its transpose (C, H) for x @ W.
    bound = 1.0 / (C ** 0.5)
    wk = jax.random.uniform(kk, (C, H), minval=-bound, maxval=bound, dtype=jnp.float32)
    wq = jax.random.uniform(kq, (C, H), minval=-bound, maxval=bound, dtype=jnp.float32)
    wv = jax.random.uniform(kv, (C, H), minval=-bound, maxval=bound, dtype=jnp.float32)

    out = head_forward(x, wk, wq, wv)
    out = jax.block_until_ready(out)

    ref = head_reference(x, wk, wq, wv)
    assert out.shape == (B, T, H)
    # bf16 MXU operands + approx reciprocal -> loosened tolerance vs f32 ref.
    assert jnp.allclose(out, ref, atol=5e-2, rtol=5e-2), "mismatch vs reference"

    print("KERNEL_OK")
</pallas_src>

<mosaic_0001>
module attributes {stable_mosaic.version = 11 : i64} {
  func.func @_head_kernel(%arg0: i32, %arg1: memref<1x8x32xbf16, #tpu.memory_space<vmem>>, %arg2: memref<32x48xbf16, #tpu.memory_space<vmem>>, %arg3: memref<1x8x16xf32, #tpu.memory_space<vmem>>) attributes {dimension_semantics = [#tpu.dimension_semantics<parallel>], iteration_bounds = array<i64: 2>, scalar_prefetch = 0 : i64, scratch_operands = 0 : i64, tpu.core_type = #tpu.core_type<tc>, window_params = [{transform_indices = @transform_0, window_bounds = array<i64: 1, 8, 32>}, {pipeline_mode = #tpu.pipeline_mode<synchronous>, transform_indices = @transform_1, window_bounds = array<i64: 32, 48>}, {transform_indices = @transform_2, window_bounds = array<i64: 1, 8, 16>}]} {
    %c0 = arith.constant 0 : index
    %c0_0 = arith.constant 0 : index
    %c0_1 = arith.constant 0 : index
    %0 = vector.load %arg1[%c0, %c0_0, %c0_1] : memref<1x8x32xbf16, #tpu.memory_space<vmem>>, vector<1x8x32xbf16>
    %c0_2 = arith.constant 0 : index
    %c0_3 = arith.constant 0 : index
    %1 = vector.load %arg2[%c0_2, %c0_3] : memref<32x48xbf16, #tpu.memory_space<vmem>>, vector<32x48xbf16>
    %cst = arith.constant dense<0.000000e+00> : vector<1x8x48xf32>
    %2 = tpu.matmul %0, %1, %cst {dimension_numbers = #tpu.dot_dimension_numbers<[2], [0], [0, 1], [1], [0, 0, 0, 1, 1, 1], [], []>} : vector<1x8x32xbf16>, vector<32x48xbf16>, vector<1x8x48xf32> -> vector<1x8x48xf32>
    %3 = vector.extract_strided_slice %2 {offsets = [0, 0, 0], sizes = [1, 8, 16], strides = [1, 1, 1]} : vector<1x8x48xf32> to vector<1x8x16xf32>
    %4 = vector.extract_strided_slice %2 {offsets = [0, 0, 16], sizes = [1, 8, 16], strides = [1, 1, 1]} : vector<1x8x48xf32> to vector<1x8x16xf32>
    %5 = vector.extract_strided_slice %2 {offsets = [0, 0, 32], sizes = [1, 8, 16], strides = [1, 1, 1]} : vector<1x8x48xf32> to vector<1x8x16xf32>
    %cst_4 = arith.constant 0.176776692 : f32
    %6 = vector.broadcast %cst_4 : f32 to vector<1x8x16xf32>
    %7 = arith.mulf %4, %6 : vector<1x8x16xf32>
    %8 = arith.truncf %7 : vector<1x8x16xf32> to vector<1x8x16xbf16>
    %9 = arith.truncf %3 : vector<1x8x16xf32> to vector<1x8x16xbf16>
    %cst_5 = arith.constant dense<0.000000e+00> : vector<1x8x8xf32>
    %10 = tpu.matmul %8, %9, %cst_5 {dimension_numbers = #tpu.dot_dimension_numbers<[2], [2], [1], [1], [0, 0, 0, 1, 1, 1], [0], [0]>} : vector<1x8x16xbf16>, vector<1x8x16xbf16>, vector<1x8x8xf32> -> vector<1x8x8xf32>
    %11 = tpu.iota {dimensions = array<i32: 1>} : vector<1x8x8xi32>
    %12 = tpu.iota {dimensions = array<i32: 2>} : vector<1x8x8xi32>
    %13 = arith.cmpi sle, %12, %11 : vector<1x8x8xi32>
    %cst_6 = arith.constant 0xFF800000 : f32
    %14 = vector.broadcast %cst_6 : f32 to vector<1x8x8xf32>
    %15 = arith.select %13, %10, %14 : vector<1x8x8xi1>, vector<1x8x8xf32>
    %cst_7 = arith.constant dense<0xFF800000> : vector<1x8xf32>
    %16 = vector.multi_reduction <maximumf>, %15, %cst_7 [2] : vector<1x8x8xf32> to vector<1x8xf32>
    %17 = vector.shape_cast %16 : vector<1x8xf32> to vector<1x8x1xf32>
    %18 = vector.broadcast %17 : vector<1x8x1xf32> to vector<1x8x8xf32>
    %19 = arith.subf %15, %18 : vector<1x8x8xf32>
    %20 = math.exp %19 : vector<1x8x8xf32>
    %cst_8 = arith.constant dense<0.000000e+00> : vector<1x8xf32>
    %21 = vector.multi_reduction <add>, %20, %cst_8 [2] : vector<1x8x8xf32> to vector<1x8xf32>
    %22 = vector.shape_cast %21 : vector<1x8xf32> to vector<1x8x1xf32>
    %23 = tpu.reciprocal %22 {approx = true} : vector<1x8x1xf32> -> vector<1x8x1xf32>
    %24 = vector.broadcast %23 : vector<1x8x1xf32> to vector<1x8x8xf32>
    %25 = arith.mulf %20, %24 : vector<1x8x8xf32>
    %26 = arith.truncf %25 : vector<1x8x8xf32> to vector<1x8x8xbf16>
    %27 = arith.truncf %5 : vector<1x8x16xf32> to vector<1x8x16xbf16>
    %cst_9 = arith.constant dense<0.000000e+00> : vector<1x8x16xf32>
    %28 = tpu.matmul %26, %27, %cst_9 {dimension_numbers = #tpu.dot_dimension_numbers<[2], [1], [1], [2], [0, 0, 0, 1, 1, 2], [0], [0]>} : vector<1x8x8xbf16>, vector<1x8x16xbf16>, vector<1x8x16xf32> -> vector<1x8x16xf32>
    %c0_10 = arith.constant 0 : index
    %c0_11 = arith.constant 0 : index
    %c0_12 = arith.constant 0 : index
    %29 = vector.load %arg3[%c0_10, %c0_11, %c0_12] : memref<1x8x16xf32, #tpu.memory_space<vmem>>, vector<1x8x16xf32>
    tpu.vector_store %arg3[%c0_10, %c0_11, %c0_12], %28 {strides = array<i32>} : memref<1x8x16xf32, #tpu.memory_space<vmem>>, vector<1x8x16xf32>,
    return
  }
  func.func @transform_0(%arg0: i32) -> (i32, i32, i32) {
    %c0_i32 = arith.constant 0 : i32
    %c0_i32_0 = arith.constant 0 : i32
    %c0_i32_1 = arith.constant 0 : i32
    return %arg0, %c0_i32, %c0_i32_0 : i32, i32, i32
  }
  func.func @transform_1(%arg0: i32) -> (i32, i32) {
    %c0_i32 = arith.constant 0 : i32
    %c0_i32_0 = arith.constant 0 : i32
    %c0_i32_1 = arith.constant 0 : i32
    return %c0_i32, %c0_i32_0 : i32, i32
  }
  func.func @transform_2(%arg0: i32) -> (i32, i32, i32) {
    %c0_i32 = arith.constant 0 : i32
    %c0_i32_0 = arith.constant 0 : i32
    %c0_i32_1 = arith.constant 0 : i32
    return %arg0, %c0_i32, %c0_i32_0 : i32, i32, i32
  }
}

</mosaic_0001>

<llo_original>
// kernel: tpu_custom_call.1
$region0: #{tpu_custom_call.1}
  #allocation0 [shape = 'u32[]', space=smem, size = 0x4, offset = 0x4, fixed_abs, tag = 'smem constant byte address 0x4 - core index']
  #allocation1 [shape = 'u32[144,128]{1,0:T(1,128)}', space=vmem, size = 0x12000, scoped, tag = 'internal scratch']
  %s0 = inlined_call_operand.hbm [shape: bf16[2,8,32], index: 0, kind: input, shape index: {}]
  %s1 = inlined_call_operand.hbm [shape: bf16[32,48], index: 1, kind: input, shape index: {}]
  %s2 = inlined_call_operand.hbm [shape: f32[2,8,16], index: 2, kind: output, shape index: {}]
  %s3 = sld [smem:[#allocation0]]
  $region49: #{tpu_custom_call.1} parent=0
    _
  %s5 = ssub.s32 1, %s3
  %s6 = scalar_select 0, %s5, %s3
  $region1: #{tpu_custom_call.1} parent=0
    #allocation2 [shape = 'u8[4096]{0}', space=vmem, size = 0x1000, scoped, tag = 'input window, operand 0']
    #allocation3 [shape = 's32[2]{0}', space=sflag, size = 0x8, scoped, tag = 'scoped memory for tpu_custom_call.1']
    #allocation4 [shape = 's32[2]{0}', space=sflag, size = 0x8, scoped, tag = 'scoped memory for tpu_custom_call.1']
    #allocation5 [shape = 'u8[8192]{0}', space=vmem, size = 0x2000, scoped, tag = 'input window, operand 1, single buffered']
    #allocation6 [shape = 's32[1]{0}', space=sflag, size = 0x4, scoped, tag = 'scoped memory for tpu_custom_call.1']
    #allocation7 [shape = 'u8[8192]{0}', space=vmem, size = 0x2000, scoped, tag = 'output window, operand 0']
    %7 = vsyncpa [#allocation3], 0
    %s8 = scalar_lea.sflag [#allocation3], 1
    %9 = vsyncpa %s8, 0
    %10 = vsyncpa [#allocation6], 0
    %11 = vsyncpa [#allocation4], 0
    %s12 = scalar_lea.sflag [#allocation4], 1
    %13 = vsyncpa %s12, 0
    loop: start=0, step=1, limit=4
    $region2: #{tpu_custom_call.1} parent=1 // loop_pre_header
      _
    $region3: #{tpu_custom_call.1} parent=1 // loop_header
      %s15 = sphi 0, %s19
      %p16 = scmp.ge.s32.totalorder %s15, 4
      %s25 = sphi 0, %s27
      %s28 = sphi 0, %s25
      %s29 = sphi 0, %s28
      %s45 = sphi 0, %s29
      %s49 = sphi 0, %s49
      %s51 = sphi 0, %s49
      %s52 = sphi 0, %s51
      %s66 = sphi 0, %s52
      %s72 = sphi 0, %s74
      %s75 = sphi 0, %s72
      %s76 = sphi 0, %s75
      %s92 = sphi 0, %s76
    $region4: #{tpu_custom_call.1} parent=1 // loop_header_branch
      %18 = sbr.rel (%p16) target = $region8
    $region5: #{tpu_custom_call.1} parent=1 // loop_body
      %s20 = ssub.s32 %s15, 1
      %s21 = ssub.s32 %s15, 2
      %s22 = sadd.s32 %s15, 1
      %s23 = ssub.s32 %s15, %s22
      %p24 = scmp.eq.s32.totalorder %s23, 0
      %s26 = sadd.s32 %s25, 1
      %s27 = scalar_select %p24, %s25, %s26
      %p30 = pneg %p24
      %p31 = scmp.eq.s32.totalorder %s15, 1
      %p32 = por %p30, %p31
      %p33 = scmp.ne.s32.totalorder %s25, %s28
      %p34 = scmp.eq.s32.totalorder %s15, 0
      %p35 = por %p33, %p34
      %p36 = scmp.ne.s32.totalorder %s25, %s28
      %p37 = scmp.eq.s32.totalorder %s20, 1
      %p38 = por %p36, %p37
      %p39 = scmp.ne.s32.totalorder %s28, %s29
      %p40 = scmp.eq.s32.totalorder %s20, 0
      %p41 = por %p39, %p40
      %p42 = scmp.ne.s32.totalorder %s28, %s29
      %p43 = scmp.eq.s32.totalorder %s21, 1
      %p44 = por %p42, %p43
      %p46 = scmp.ne.s32.totalorder %s29, %s45
      %p47 = scmp.eq.s32.totalorder %s21, 0
      %p48 = por %p46, %p47
      %s50 = sadd.s32 %s49, 1
      %p53 = scmp.eq.s32.totalorder %s15, 1
      %p54 = scmp.ne.s32.totalorder %s49, %s51
      %p55 = scmp.eq.s32.totalorder %s15, 0
      %p56 = por %p54, %p55
      %p57 = scmp.ne.s32.totalorder %s49, %s51
      %p58 = scmp.eq.s32.totalorder %s20, 1
      %p59 = por %p57, %p58
      %p60 = scmp.ne.s32.totalorder %s51, %s52
      %p61 = scmp.eq.s32.totalorder %s20, 0
      %p62 = por %p60, %p61
      %p63 = scmp.ne.s32.totalorder %s51, %s52
      %p64 = scmp.eq.s32.totalorder %s21, 1
      %p65 = por %p63, %p64
      %p67 = scmp.ne.s32.totalorder %s52, %s66
      %p68 = scmp.eq.s32.totalorder %s21, 0
      %p69 = por %p67, %p68
      %s70 = ssub.s32 %s15, %s22
      %p71 = scmp.eq.s32.totalorder %s70, 0
      %s73 = sadd.s32 %s72, 1
      %s74 = scalar_select %p71, %s72, %s73
      %p77 = pneg %p71
      %p78 = scmp.eq.s32.totalorder %s15, 1
      %p79 = por %p77, %p78
      %p80 = scmp.ne.s32.totalorder %s72, %s75
      %p81 = scmp.eq.s32.totalorder %s15, 0
      %p82 = por %p80, %p81
      %p83 = scmp.ne.s32.totalorder %s72, %s75
      %p84 = scmp.eq.s32.totalorder %s20, 1
      %p85 = por %p83, %p84
      %p86 = scmp.ne.s32.totalorder %s75, %s76
      %p87 = scmp.eq.s32.totalorder %s20, 0
      %p88 = por %p86, %p87
      %p89 = scmp.ne.s32.totalorder %s75, %s76
      %p90 = scmp.eq.s32.totalorder %s21, 1
      %p91 = por %p89, %p90
      %p93 = scmp.ne.s32.totalorder %s76, %s92
      %p94 = scmp.eq.s32.totalorder %s21, 0
      %p95 = por %p93, %p94
      %p96 = scmp.le.s32.totalorder 1, %s15
      %p97 = scmp.lt.s32.totalorder %s15, 3
      %p98 = pnand %p96, %p97
      %p99 = pneg %p98
      // Predicated region
      $region9: #{tpu_custom_call.1} parent=5 // pred_check
        _
      $region10: #{tpu_custom_call.1} parent=5 // pred_check_branch
        %101 = sbr.rel (%p98) target = $region12
      $region11: #{tpu_custom_call.1} parent=5 // pred_region
        %s102 = ssub.s32 %s15, 1
        // Predicated region
        $region13: #{tpu_custom_call.1} parent=11 // pred_check
          %p103 = pneg %p62
        $region14: #{tpu_custom_call.1} parent=11 // pred_check_branch
          %105 = sbr.rel (%p103) target = $region16
        $region15: #{tpu_custom_call.1} parent=11 // pred_region
          %s107 = ssub.s32 256, 256
          %108 = vsyncadd [#allocation6], %s107
          %s109 = sshll.u32 [#allocation5], 4
          %s110 = int_to_ptr.vmem [resolvable:$true] %s109
          %115 = dma.hbm_to_vmem [thread:$0]  %s1, 256, %s110, [#allocation6], 64, 64, 4
        $region16: #{tpu_custom_call.1} parent=11 // pred_fallthru
          _
      $region12: #{tpu_custom_call.1} parent=5 // pred_fallthru
        _
      %p116 = scmp.lt.s32.totalorder %s15, 2
      // Predicated region
      $region17: #{tpu_custom_call.1} parent=5 // pred_check
        %p117 = pneg %p116
      $region18: #{tpu_custom_call.1} parent=5 // pred_check_branch
        %119 = sbr.rel (%p117) target = $region20
      $region19: #{tpu_custom_call.1} parent=5 // pred_region
        // Predicated region
        $region21: #{tpu_custom_call.1} parent=19 // pred_check
          %p120 = pneg %p35
        $region22: #{tpu_custom_call.1} parent=19 // pred_check_branch
          %122 = sbr.rel (%p120) target = $region24
        $region23: #{tpu_custom_call.1} parent=19 // pred_region
          %s123 = sand.u32 %s25, 1
          %s124 = scalar_lea.sflag [#allocation3], %s123
          %s125 = sand.u32 %s25, 1
          %s126 = smul.addr %s125, 4
          %s127 = scalar_lea.vmem [#allocation2], %s126
          %s129 = ssub.s32 64, 64
          %130 = vsyncadd %s124, %s129
          %s131 = smul.addr %s15, 64
          %s132 = scalar_lea.hbm %s0, %s131
          %s134 = sshll.u32 %s127, 4
          %s135 = int_to_ptr.vmem [resolvable:$true] %s134
          %137 = dma.hbm_to_vmem [thread:$0]  %s132, 64, %s135, %s124
        $region24: #{tpu_custom_call.1} parent=19 // pred_fallthru
          _
      $region20: #{tpu_custom_call.1} parent=5 // pred_fallthru
        _
      %p138 = scmp.le.s32.totalorder 1, %s15
      %p139 = scmp.lt.s32.totalorder %s15, 3
      %p140 = pnand %p138, %p139
      %p141 = pneg %p140
      // Predicated region
      $region25: #{tpu_custom_call.1} parent=5 // pred_check
        _
      $region26: #{tpu_custom_call.1} parent=5 // pred_check_branch
        %143 = sbr.rel (%p140) target = $region28
      $region27: #{tpu_custom_call.1} parent=5 // pred_region
        %s144 = ssub.s32 %s15, 1
        %s145 = sand.u32 %s28, 1
        %s146 = scalar_lea.sflag [#allocation3], %s145
        %s147 = sand.u32 %s28, 1
        %s148 = smul.addr %s147, 4
        %s149 = scalar_lea.vmem [#allocation2], %s148
        // Predicated region
        $region29: #{tpu_custom_call.1} parent=27 // pred_check
          %p150 = pneg %p41
        $region30: #{tpu_custom_call.1} parent=27 // pred_check_branch
          %152 = sbr.rel (%p150) target = $region32
        $region31: #{tpu_custom_call.1} parent=27 // pred_region
          %153 = dma.done %s146, 64
        $region32: #{tpu_custom_call.1} parent=27 // pred_fallthru
          _
        // Predicated region
        $region33: #{tpu_custom_call.1} parent=27 // pred_check
          %p154 = pneg %p62
        $region34: #{tpu_custom_call.1} parent=27 // pred_check_branch
          %156 = sbr.rel (%p154) target = $region36
        $region35: #{tpu_custom_call.1} parent=27 // pred_region
          %157 = dma.done [#allocation6], 256
        $region36: #{tpu_custom_call.1} parent=27 // pred_fallthru
          _
        %s158 = sand.u32 %s28, 1
        %s159 = scalar_lea.sflag [#allocation3], %s158
        %s160 = sand.u32 %s28, 1
        %s161 = smul.addr %s160, 4
        %s162 = scalar_lea.vmem [#allocation2], %s161
        %p163 = pneg %p41
        %p164 = pneg %p38
        %p165 = pneg %p62
        %p166 = pneg %p59
        %p167 = pneg %p88
        %p168 = pneg %p85
        %s169 = sand.u32 %s75, 1
        %s170 = scalar_lea.sflag [#allocation4], %s169
        %s171 = sand.u32 %s75, 1
        %s172 = smul.addr %s171, 8
        %s173 = scalar_lea.vmem [#allocation7], %s172
        %v175 = vld [vmem:[%s149] sm:$0xf]
        %v176 = vld [vmem:[#allocation5] sm:$0xf]
        %v177 = vld [vmem:[#allocation5 + $0x4] sm:$0xf]
        %v178 = vld [vmem:[#allocation5 + $0x8] sm:$0xf]
        %v179 = vld [vmem:[#allocation5 + $0xc] sm:$0xf]
        %v184 = vunpack.c.l.b16 %v176
        %v185 = vunpack.c.l.b16 %v177
        %v186 = vunpack.c.l.b16 %v178
        %v187 = vunpack.c.l.b16 %v179
        %v188 = vpack.c.b16 %v185, %v184
        %v189 = vpack.c.b16 %v187, %v186
        %vm192 = vcmask 261120
        %v194 = vsel %vm192, %v175, 0
        %196 = vmatprep.subr.bf16.mxu0 0
        %197 = vmatpush1.bf16.msra.mxu0 %v188
        %198 = vmatprep.subr.bf16.mxu0 0
        %199 = vmatpush1.bf16.msra.mxu0 %v189
        %200 = vmatprep.subr.bf16.mxu0 0
        %201 = vmatpush1.bf16.msra.mxu0 0
        %202 = vmatprep.subr.bf16.mxu0 0
        %203 = vmatpush1.bf16.msra.mxu0 0
        %204 = vmatprep.subr.bf16.mxu0 0
        %205 = vmatpush1.bf16.msra.mxu0 0
        %206 = vmatprep.subr.bf16.mxu0 0
        %207 = vmatpush1.bf16.msra.mxu0 0
        %208 = vmatprep.subr.bf16.mxu0 0
        %209 = vmatpush1.bf16.msra.mxu0 0
        %210 = vmatprep.subr.bf16.mxu0 0
        %211 = vmatpush1.bf16.msra.mxu0 0
        %212 = vmatprep.subr.bf16.mxu0 0
        %213 = vmatpush1.bf16.msra.mxu0 0
        %214 = vmatprep.subr.bf16.mxu0 0
        %215 = vmatpush1.bf16.msra.mxu0 0
        %216 = vmatprep.subr.bf16.mxu0 0
        %217 = vmatpush1.bf16.msra.mxu0 0
        %218 = vmatprep.subr.bf16.mxu0 0
        %219 = vmatpush1.bf16.msra.mxu0 0
        %220 = vmatprep.subr.bf16.mxu0 0
        %221 = vmatpush1.bf16.msra.mxu0 0
        %222 = vmatprep.subr.bf16.mxu0 0
        %223 = vmatpush1.bf16.msra.mxu0 0
        %224 = vmatprep.subr.bf16.mxu0 0
        %225 = vmatpush1.bf16.msra.mxu0 0
        %226 = vmatprep.subr.bf16.mxu0 0
        %227 = vmatpush1.bf16.msra.mxu0 0
        %228 = vmatprep.mubr.bf16.mxu0 0
        %229 = vmatmul.mubr.bf16.gmra.mrb[0].mxu0 %v194
        %v230 = vpop.f32.mrb[0].mxu0
        %v231 = vadd.f32 0.0, %v230
        %v232 = vpop.f32.mrb[0].mxu0
        %v233 = vpop.f32.mrb[0].mxu0
        %v234 = vpop.f32.mrb[0].mxu0
        %235 = vdwg.mxu0
        %v236 = vmul.f32 %v231, 0.17677669
        %v237 = vpack.c.bf16 %v236, %v236
        %v238 = vpack.c.bf16 %v231, %v231
        %240 = vrot.lane.b32.xlu0 %v237, 112
        %v241 = vpop.permute.xlu0 %240
        %vm242 = vcmask 130048
        %v244 = vsel %vm242, %v241, 0
        %v247 = vsel %vm242, %v238, 0
        %249 = vmatprep.subr.bf16.mxu0 0
        %250 = vmatpush1.bf16.xpose.msra.mxu0 %v247
        %251 = vmatprep.subr.bf16.mxu0 0
        %252 = vmatpush1.bf16.xpose.msra.mxu0 0
        %253 = vmatprep.subr.bf16.mxu0 0
        %254 = vmatpush1.bf16.xpose.msra.mxu0 0
        %255 = vmatprep.subr.bf16.mxu0 0
        %256 = vmatpush1.bf16.xpose.msra.mxu0 0
        %257 = vmatprep.subr.bf16.mxu0 0
        %258 = vmatpush1.bf16.xpose.msra.mxu0 0
        %259 = vmatprep.subr.bf16.mxu0 0
        %260 = vmatpush1.bf16.xpose.msra.mxu0 0
        %261 = vmatprep.subr.bf16.mxu0 0
        %262 = vmatpush1.bf16.xpose.msra.mxu0 0
        %263 = vmatprep.subr.bf16.mxu0 0
        %264 = vmatpush1.bf16.xpose.msra.mxu0 0
        %265 = vmatprep.subr.bf16.mxu0 0
        %266 = vmatpush1.bf16.xpose.msra.mxu0 0
        %267 = vmatprep.subr.bf16.mxu0 0
        %268 = vmatpush1.bf16.xpose.msra.mxu0 0
        %269 = vmatprep.subr.bf16.mxu0 0
        %270 = vmatpush1.bf16.xpose.msra.mxu0 0
        %271 = vmatprep.subr.bf16.mxu0 0
        %272 = vmatpush1.bf16.xpose.msra.mxu0 0
        %273 = vmatprep.subr.bf16.mxu0 0
        %274 = vmatpush1.bf16.xpose.msra.mxu0 0
        %275 = vmatprep.subr.bf16.mxu0 0
        %276 = vmatpush1.bf16.xpose.msra.mxu0 0
        %277 = vmatprep.subr.bf16.mxu0 0
        %278 = vmatpush1.bf16.xpose.msra.mxu0 0
        %279 = vmatprep.subr.bf16.mxu0 0
        %280 = vmatpush1.bf16.xpose.msra.mxu0 0
        %281 = vmatprep.mubr.bf16.mxu0 0
        %282 = vmatmul.mubr.bf16.gmra.mrb[0].mxu0 %v244
        %v283 = vpop.f32.mrb[0].mxu0
        %v284 = vadd.f32 0.0, %v283
        %v285 = vpop.f32.mrb[0].mxu0
        %v286 = vpop.f32.mrb[0].mxu0
        %v287 = vpop.f32.mrb[0].mxu0
        %288 = vdwg.mxu0
        %v289 = vlaneseq
        %v290 = vshrl.u32 %v289, 7
        %v291 = vlaneseq
        %v292 = vand.u32 %v291, 127
        %vm293 = vcmp.le.s32.totalorder %v292, %v290
        %v294 = vsel %vm293, %v284, -inf
        %vm295 = vcmask 64512
        %v296 = vsel %vm295, %v294, -inf
        %297 = vmax.xlane.f32.xlu0 %v296
        %v298 = vpop.xlane.xlu0 %297
        %v299 = vsub.f32 %v294, %v298
        %v300 = vmul.f32 %v299, 1.442695
        %v301 = vpow.pop %v300
        %v302 = vsel %vm295, %v301, 0.0
        %303 = vadd.xlane.f32.xlu0 %v302
        %v304 = vpop.xlane.xlu0 %303
        %v305 = vrcp.pop %v304
        %v306 = vmul.f32 %v301, %v305
        %v307 = vpack.c.bf16 %v306, %v306
        %309 = vrot.lane.b32.xlu0 %v238, 96
        %v310 = vpop.permute.xlu0 %309
        %v312 = vsel %vm295, %v307, 0
        %vm314 = vcmask 1043456
        %v316 = vsel %vm314, %v310, 0
        %318 = vmatprep.subr.bf16.mxu0 0
        %319 = vmatpush1.bf16.msra.mxu0 %v316
        %320 = vmatprep.subr.bf16.mxu0 0
        %321 = vmatpush1.bf16.msra.mxu0 0
        %322 = vmatprep.subr.bf16.mxu0 0
        %323 = vmatpush1.bf16.msra.mxu0 0
        %324 = vmatprep.subr.bf16.mxu0 0
        %325 = vmatpush1.bf16.msra.mxu0 0
        %326 = vmatprep.subr.bf16.mxu0 0
        %327 = vmatpush1.bf16.msra.mxu0 0
        %328 = vmatprep.subr.bf16.mxu0 0
        %329 = vmatpush1.bf16.msra.mxu0 0
        %330 = vmatprep.subr.bf16.mxu0 0
        %331 = vmatpush1.bf16.msra.mxu0 0
        %332 = vmatprep.subr.bf16.mxu0 0
        %333 = vmatpush1.bf16.msra.mxu0 0
        %334 = vmatprep.subr.bf16.mxu0 0
        %335 = vmatpush1.bf16.msra.mxu0 0
        %336 = vmatprep.subr.bf16.mxu0 0
        %337 = vmatpush1.bf16.msra.mxu0 0
        %338 = vmatprep.subr.bf16.mxu0 0
        %339 = vmatpush1.bf16.msra.mxu0 0
        %340 = vmatprep.subr.bf16.mxu0 0
        %341 = vmatpush1.bf16.msra.mxu0 0
        %342 = vmatprep.subr.bf16.mxu0 0
        %343 = vmatpush1.bf16.msra.mxu0 0
        %344 = vmatprep.subr.bf16.mxu0 0
        %345 = vmatpush1.bf16.msra.mxu0 0
        %346 = vmatprep.subr.bf16.mxu0 0
        %347 = vmatpush1.bf16.msra.mxu0 0
        %348 = vmatprep.subr.bf16.mxu0 0
        %349 = vmatpush1.bf16.msra.mxu0 0
        %350 = vmatprep.mubr.bf16.mxu0 0
        %351 = vmatmul.mubr.bf16.gmra.mrb[0].mxu0 %v312
        %v352 = vpop.f32.mrb[0].mxu0
        %v353 = vadd.f32 0.0, %v352
        %v354 = vpop.f32.mrb[0].mxu0
        %v355 = vpop.f32.mrb[0].mxu0
        %v356 = vpop.f32.mrb[0].mxu0
        %357 = vdwg.mxu0
        %358 = vst.msk [vmem:[%s173] sm:$0xff] %vm242, %v353
        %s359 = sand.u32 %s75, 1
        %s360 = scalar_lea.sflag [#allocation4], %s359
        %s361 = sand.u32 %s75, 1
        %s362 = smul.addr %s361, 8
        %s363 = scalar_lea.vmem [#allocation7], %s362
        // Predicated region
        $region37: #{tpu_custom_call.1} parent=27 // pred_check
          %p364 = pneg %p85
        $region38: #{tpu_custom_call.1} parent=27 // pred_check_branch
          %366 = sbr.rel (%p364) target = $region40
        $region39: #{tpu_custom_call.1} parent=27 // pred_region
          %s368 = ssub.s32 128, 128
          %369 = vsyncadd %s360, %s368
          %s370 = smul.addr %s20, 128
          %s371 = scalar_lea.hbm %s2, %s370
          %s373 = sshll.u32 %s363, 4
          %s374 = int_to_ptr.vmem [resolvable:$true] %s373
          %376 = dma.vmem_to_hbm [thread:$0]  %s374, 128, %s371, %s360
        $region40: #{tpu_custom_call.1} parent=27 // pred_fallthru
          _
      $region28: #{tpu_custom_call.1} parent=5 // pred_fallthru
        _
      %p377 = scmp.le.s32.totalorder 2, %s15
      // Predicated region
      $region41: #{tpu_custom_call.1} parent=5 // pred_check
        %p378 = pneg %p377
      $region42: #{tpu_custom_call.1} parent=5 // pred_check_branch
        %380 = sbr.rel (%p378) target = $region44
      $region43: #{tpu_custom_call.1} parent=5 // pred_region
        %s381 = ssub.s32 %s15, 2
        // Predicated region
        $region45: #{tpu_custom_call.1} parent=43 // pred_check
          %p382 = pneg %p91
        $region46: #{tpu_custom_call.1} parent=43 // pred_check_branch
          %384 = sbr.rel (%p382) target = $region48
        $region47: #{tpu_custom_call.1} parent=43 // pred_region
          %s385 = sand.u32 %s76, 1
          %s386 = scalar_lea.sflag [#allocation4], %s385
          %s387 = sand.u32 %s76, 1
          %s388 = smul.addr %s387, 8
          %s389 = scalar_lea.vmem [#allocation7], %s388
          %390 = dma.done %s386, 128
        $region48: #{tpu_custom_call.1} parent=43 // pred_fallthru
          _
      $region44: #{tpu_custom_call.1} parent=5 // pred_fallthru
        _
    $region6: #{tpu_custom_call.1} parent=1 // loop_footer
      %s19 = sadd.s32 1, %s15
    $region7: #{tpu_custom_call.1} parent=1 // loop_footer_branch
      %14 = sbr.rel target = $region3
    $region8: #{tpu_custom_call.1} parent=1 // loop_exit
      _
    %391 = vsyncpa [#allocation3], 1
    %s392 = scalar_lea.sflag [#allocation3], 1
    %393 = vsyncpa %s392, 1
    %394 = vsyncpa [#allocation6], 1
    %395 = vsyncpa [#allocation4], 1
    %s396 = scalar_lea.sflag [#allocation4], 1
    %397 = vsyncpa %s396, 1

</llo_original>
